<compile_context>
chip_gen: v5e
topology: v5e:2x2
jax: 0.10.0
libtpu: 0.0.40
codegen_flags: <defaults>
</compile_context>

<pallas_src>
import jax
import jax.numpy as jnp
from jax.experimental import pallas as pl
from jax.experimental.pallas import tpu as pltpu


# ---------------------------------------------------------------------------
# Fused kernel: sensor softmax + weighting + knowledge-driven stats +
#               Conv1d/ReLU/max-pool deep features + 4-layer classifier MLP
# ---------------------------------------------------------------------------
def fused_forward_kernel(x_ref, sw_ref, taps_ref, w1_ref, b1_ref, w2_ref,
                         b2_ref, w3_ref, b3_ref, w4_ref, b4_ref, out_ref):
    # x_ref:    (R, L)        R = S*B, rows ordered sensor-major (r = s*B + b)
    # sw_ref:   (R, 1)        raw sensor weight per row (each sensor repeated B times)
    # taps_ref: (4, D, R, 1)  conv taps [w(t-1), w(t), w(t+1), bias], pre-broadcast per row
    # w1_ref:   (FP, H1)      first MLP weight, rows zero-padded from F to FP
    # b1..b4, w2..w4:         classifier params ; out_ref: (B, 2)
    R, L = x_ref.shape
    D = taps_ref.shape[1]
    B = out_ref.shape[0]
    S = R // B
    F = S * (D + 4)
    FP = w1_ref.shape[0]

    # --- softmax over sensors, computed in-kernel on the repeated column ------
    # (the column sum counts every sensor B times, so rescale by B => exact)
    sw = sw_ref[...]
    e = jnp.exp(sw - jnp.max(sw, axis=0, keepdims=True))
    w_col = e * (B / jnp.sum(e, axis=0, keepdims=True))               # (R, 1)

    xw = x_ref[...] * w_col                                           # (R, L)

    # --- knowledge-driven stats over time (np.var => population variance) ----
    mean = jnp.mean(xw, axis=1, keepdims=True)                        # (R, 1)
    var = jnp.mean((xw - mean) ** 2, axis=1, keepdims=True)
    mx = jnp.max(xw, axis=1, keepdims=True)
    mn = jnp.min(xw, axis=1, keepdims=True)

    # --- Conv1d(1->D, k=3, pad=1) + ReLU + AdaptiveMaxPool1d(1) ---------------
    # Vectorized over D as one broadcast over a (D, R, L) volume.  Bias + ReLU
    # are applied after the time-max (exactly equivalent, cheaper on the VPU).
    zcol = jnp.zeros((R, 1), jnp.float32)
    x_m1 = jnp.concatenate([zcol, xw[:, :-1]], axis=1)                # x[t-1]
    x_p1 = jnp.concatenate([xw[:, 1:], zcol], axis=1)                 # x[t+1]
    conv = (taps_ref[0] * x_m1[None, :, :] +
            taps_ref[1] * xw[None, :, :] +
            taps_ref[2] * x_p1[None, :, :])                           # (D, R, L)
    pooled = jnp.maximum(jnp.max(conv, axis=2, keepdims=True)
                         + taps_ref[3], 0.0)                          # (D, R, 1)
    # reorder (D, R) -> (R, D) with a tiny lane concat of pooled columns
    deep = jnp.concatenate([pooled[d] for d in range(D)], axis=1)     # (R, D)

    # --- fused features per (sensor, batch) row: [deep_0..deep_{D-1}, mean, var, max, min]
    fused_rows = jnp.concatenate([deep, mean, var, mx, mn], axis=1)   # (R, D+4)

    # --- regroup sensor-major rows into per-batch, lane-dense feature vectors,
    #     zero-padded to FP lanes (matches the zero-padded rows of w1)
    blocks = [fused_rows[s * B:(s + 1) * B, :] for s in range(S)]
    if FP > F:
        blocks.append(jnp.zeros((B, FP - F), jnp.float32))
    fused = jnp.concatenate(blocks, axis=1)                           # (B, FP)

    # --- classifier MLP: F -> 64 -> 32 -> 16 -> 2 -----------------------------
    h = jnp.maximum(
        jnp.dot(fused, w1_ref[...], preferred_element_type=jnp.float32) + b1_ref[...], 0.0)
    h = jnp.maximum(
        jnp.dot(h, w2_ref[...], preferred_element_type=jnp.float32) + b2_ref[...], 0.0)
    h = jnp.maximum(
        jnp.dot(h, w3_ref[...], preferred_element_type=jnp.float32) + b3_ref[...], 0.0)
    out_ref[...] = jnp.dot(h, w4_ref[...], preferred_element_type=jnp.float32) + b4_ref[...]


# ---------------------------------------------------------------------------
# Wrapper: layout plumbing only (all fused by XLA under the same jit)
# ---------------------------------------------------------------------------
@jax.jit
def fault_prediction_forward(x, params):
    x = x.astype(jnp.float32)
    B, L, S = x.shape
    D = params["conv_w"].shape[0]
    F = S * (D + 4)
    FP = pl.cdiv(F, 128) * 128      # lane-pad the fused feature row
    R = S * B

    # sensor-major row layout: row r = s*B + b holds x[b, :, s]
    x_rows = jnp.transpose(x, (2, 0, 1)).reshape(R, L)
    # raw sensor weight per row (softmax happens inside the kernel)
    sw_rows = jnp.repeat(params["sensor_weights"].astype(jnp.float32), B).reshape(R, 1)
    # conv taps [w(t-1), w(t), w(t+1), bias] pre-broadcast to (4, D, R, 1)
    taps = jnp.concatenate(
        [jnp.transpose(params["conv_w"].astype(jnp.float32)),         # (3, D)
         params["conv_b"].astype(jnp.float32)[None, :]], axis=0)      # (4, D)
    taps = jnp.broadcast_to(taps[:, :, None, None], (4, D, R, 1))
    # first-layer weight: rows zero-padded so the padded fused row is exact
    w1p = jnp.pad(params["w1"].astype(jnp.float32), ((0, FP - F), (0, 0)))

    vmem = pl.BlockSpec(memory_space=pltpu.MemorySpace.VMEM)
    out = pl.pallas_call(
        fused_forward_kernel,
        out_shape=jax.ShapeDtypeStruct((B, 2), jnp.float32),
        in_specs=[vmem] * 11,
        out_specs=vmem,
    )(x_rows, sw_rows, taps, w1p,
      params["b1"], params["w2"], params["b2"],
      params["w3"], params["b3"], params["w4"], params["b4"])
    return out


# ---------------------------------------------------------------------------
# Pure-JAX reference (numerical sanity check)
# ---------------------------------------------------------------------------
def reference_forward(x, params):
    B, L, S = x.shape
    w = jax.nn.softmax(params["sensor_weights"])
    xw = jnp.transpose(x, (0, 2, 1)) * w[None, :, None]                 # (B, S, L)

    mean = xw.mean(axis=2, keepdims=True)
    var = ((xw - mean) ** 2).mean(axis=2, keepdims=True)
    kd = jnp.concatenate(
        [mean, var, xw.max(axis=2, keepdims=True), xw.min(axis=2, keepdims=True)], axis=2)

    xp = jnp.pad(xw, ((0, 0), (0, 0), (1, 1)))
    windows = jnp.stack([xp[..., :-2], xp[..., 1:-1], xp[..., 2:]], axis=-1)  # (B,S,L,3)
    conv = jnp.einsum("bslk,dk->bsld", windows, params["conv_w"]) + params["conv_b"]
    deep = jnp.max(jnp.maximum(conv, 0.0), axis=2)                      # (B, S, D)

    fused = jnp.concatenate([deep, kd], axis=2).reshape(B, -1)
    h = jnp.maximum(fused @ params["w1"] + params["b1"], 0.0)
    h = jnp.maximum(h @ params["w2"] + params["b2"], 0.0)
    h = jnp.maximum(h @ params["w3"] + params["b3"], 0.0)
    return h @ params["w4"] + params["b4"]


if __name__ == "__main__":
    # num_sensors=4, input_length=16, deep_feature_dim=8, batch=2
    B, L, S, D = 2, 16, 4, 8
    F = S * (D + 4)

    key = jax.random.PRNGKey(0)
    ks = jax.random.split(key, 12)
    x = jax.random.normal(ks[0], (B, L, S), jnp.float32)

    params = {
        # nn.Parameter(torch.ones(num_sensors)) -- perturbed so softmax is exercised
        "sensor_weights": 1.0 + 0.25 * jax.random.normal(ks[11], (S,), jnp.float32),
        # Conv1d(1, D, k=3) weight (D,1,3) squeezed -> (D,3); bias (D,)
        "conv_w": 0.2 * jax.random.normal(ks[1], (D, 3), jnp.float32),
        "conv_b": 0.1 * jax.random.normal(ks[2], (D,), jnp.float32),
        # Linear weights stored as (in, out); biases as (1, out)
        "w1": 0.1 * jax.random.normal(ks[3], (F, 64), jnp.float32),
        "b1": 0.1 * jax.random.normal(ks[4], (1, 64), jnp.float32),
        "w2": 0.1 * jax.random.normal(ks[5], (64, 32), jnp.float32),
        "b2": 0.1 * jax.random.normal(ks[6], (1, 32), jnp.float32),
        "w3": 0.1 * jax.random.normal(ks[7], (32, 16), jnp.float32),
        "b3": 0.1 * jax.random.normal(ks[8], (1, 16), jnp.float32),
        "w4": 0.1 * jax.random.normal(ks[9], (16, 2), jnp.float32),
        "b4": 0.1 * jax.random.normal(ks[10], (1, 2), jnp.float32),
    }

    out = jax.block_until_ready(fault_prediction_forward(x, params))
    assert out.shape == (B, 2) and out.dtype == jnp.float32

    ref = jax.block_until_ready(reference_forward(x, params))
    assert jnp.allclose(out, ref, atol=1e-4, rtol=1e-4), (out, ref)

    print("KERNEL_OK")
</pallas_src>

<mosaic_0001>
module attributes {stable_mosaic.version = 11 : i64} {
  func.func @fused_forward_kernel(%arg0: memref<8x16xf32, #tpu.memory_space<vmem>>, %arg1: memref<8x1xf32, #tpu.memory_space<vmem>>, %arg2: memref<4x8x8x1xf32, #tpu.memory_space<vmem>>, %arg3: memref<128x64xf32, #tpu.memory_space<vmem>>, %arg4: memref<1x64xf32, #tpu.memory_space<vmem>>, %arg5: memref<64x32xf32, #tpu.memory_space<vmem>>, %arg6: memref<1x32xf32, #tpu.memory_space<vmem>>, %arg7: memref<32x16xf32, #tpu.memory_space<vmem>>, %arg8: memref<1x16xf32, #tpu.memory_space<vmem>>, %arg9: memref<16x2xf32, #tpu.memory_space<vmem>>, %arg10: memref<1x2xf32, #tpu.memory_space<vmem>>, %arg11: memref<2x2xf32, #tpu.memory_space<vmem>>) attributes {dimension_semantics = [], scalar_prefetch = 0 : i64, scratch_operands = 0 : i64, tpu.core_type = #tpu.core_type<tc>} {
    %c0 = arith.constant 0 : index
    %c0_0 = arith.constant 0 : index
    %0 = vector.load %arg1[%c0, %c0_0] : memref<8x1xf32, #tpu.memory_space<vmem>>, vector<8x1xf32>
    %cst = arith.constant dense<0xFF800000> : vector<1xf32>
    %1 = vector.multi_reduction <maximumf>, %0, %cst [0] : vector<8x1xf32> to vector<1xf32>
    %2 = vector.shape_cast %1 : vector<1xf32> to vector<1x1xf32>
    %3 = vector.broadcast %2 : vector<1x1xf32> to vector<8x1xf32>
    %4 = arith.subf %0, %3 : vector<8x1xf32>
    %5 = math.exp %4 : vector<8x1xf32>
    %cst_1 = arith.constant dense<0.000000e+00> : vector<1xf32>
    %6 = vector.multi_reduction <add>, %5, %cst_1 [0] : vector<8x1xf32> to vector<1xf32>
    %7 = vector.shape_cast %6 : vector<1xf32> to vector<1x1xf32>
    %cst_2 = arith.constant 2.000000e+00 : f32
    %8 = vector.broadcast %cst_2 : f32 to vector<1x1xf32>
    %9 = arith.divf %8, %7 : vector<1x1xf32>
    %10 = vector.broadcast %9 : vector<1x1xf32> to vector<8x1xf32>
    %11 = arith.mulf %5, %10 : vector<8x1xf32>
    %c0_3 = arith.constant 0 : index
    %c0_4 = arith.constant 0 : index
    %12 = vector.load %arg0[%c0_3, %c0_4] : memref<8x16xf32, #tpu.memory_space<vmem>>, vector<8x16xf32>
    %13 = vector.broadcast %11 : vector<8x1xf32> to vector<8x16xf32>
    %14 = arith.mulf %12, %13 : vector<8x16xf32>
    %cst_5 = arith.constant dense<0.000000e+00> : vector<8xf32>
    %15 = vector.multi_reduction <add>, %14, %cst_5 [1] : vector<8x16xf32> to vector<8xf32>
    %16 = vector.shape_cast %15 : vector<8xf32> to vector<8x1xf32>
    %cst_6 = arith.constant 1.600000e+01 : f32
    %17 = vector.broadcast %cst_6 : f32 to vector<8x1xf32>
    %18 = arith.divf %16, %17 : vector<8x1xf32>
    %19 = vector.broadcast %18 : vector<8x1xf32> to vector<8x16xf32>
    %20 = arith.subf %14, %19 : vector<8x16xf32>
    %21 = arith.mulf %20, %20 : vector<8x16xf32>
    %cst_7 = arith.constant dense<0.000000e+00> : vector<8xf32>
    %22 = vector.multi_reduction <add>, %21, %cst_7 [1] : vector<8x16xf32> to vector<8xf32>
    %23 = vector.shape_cast %22 : vector<8xf32> to vector<8x1xf32>
    %cst_8 = arith.constant 1.600000e+01 : f32
    %24 = vector.broadcast %cst_8 : f32 to vector<8x1xf32>
    %25 = arith.divf %23, %24 : vector<8x1xf32>
    %cst_9 = arith.constant dense<0xFF800000> : vector<8xf32>
    %26 = vector.multi_reduction <maximumf>, %14, %cst_9 [1] : vector<8x16xf32> to vector<8xf32>
    %27 = vector.shape_cast %26 : vector<8xf32> to vector<8x1xf32>
    %cst_10 = arith.constant dense<0x7F800000> : vector<8xf32>
    %28 = vector.multi_reduction <minimumf>, %14, %cst_10 [1] : vector<8x16xf32> to vector<8xf32>
    %29 = vector.shape_cast %28 : vector<8xf32> to vector<8x1xf32>
    %cst_11 = arith.constant 0.000000e+00 : f32
    %30 = vector.broadcast %cst_11 : f32 to vector<8x1xf32>
    %31 = vector.extract_strided_slice %14 {offsets = [0, 0], sizes = [8, 15], strides = [1, 1]} : vector<8x16xf32> to vector<8x15xf32>
    %32 = tpu.concatenate %30, %31 in 1 : vector<8x1xf32>, vector<8x15xf32> -> vector<8x16xf32>
    %33 = vector.extract_strided_slice %14 {offsets = [0, 1], sizes = [8, 15], strides = [1, 1]} : vector<8x16xf32> to vector<8x15xf32>
    %34 = tpu.concatenate %33, %30 in 1 : vector<8x15xf32>, vector<8x1xf32> -> vector<8x16xf32>
    %c0_12 = arith.constant 0 : index
    %c0_13 = arith.constant 0 : index
    %c0_14 = arith.constant 0 : index
    %c0_15 = arith.constant 0 : index
    %35 = vector.load %arg2[%c0_12, %c0_13, %c0_14, %c0_15] : memref<4x8x8x1xf32, #tpu.memory_space<vmem>>, vector<1x8x8x1xf32>
    %36 = vector.shape_cast %35 : vector<1x8x8x1xf32> to vector<8x8x1xf32>
    %37 = vector.shape_cast %32 : vector<8x16xf32> to vector<1x8x16xf32>
    %38 = vector.broadcast %36 : vector<8x8x1xf32> to vector<8x8x16xf32>
    %39 = vector.broadcast %37 : vector<1x8x16xf32> to vector<8x8x16xf32>
    %40 = arith.mulf %38, %39 : vector<8x8x16xf32>
    %c1 = arith.constant 1 : index
    %c0_16 = arith.constant 0 : index
    %c0_17 = arith.constant 0 : index
    %c0_18 = arith.constant 0 : index
    %41 = vector.load %arg2[%c1, %c0_16, %c0_17, %c0_18] : memref<4x8x8x1xf32, #tpu.memory_space<vmem>>, vector<1x8x8x1xf32>
    %42 = vector.shape_cast %41 : vector<1x8x8x1xf32> to vector<8x8x1xf32>
    %43 = vector.shape_cast %14 : vector<8x16xf32> to vector<1x8x16xf32>
    %44 = vector.broadcast %42 : vector<8x8x1xf32> to vector<8x8x16xf32>
    %45 = vector.broadcast %43 : vector<1x8x16xf32> to vector<8x8x16xf32>
    %46 = arith.mulf %44, %45 : vector<8x8x16xf32>
    %47 = arith.addf %40, %46 : vector<8x8x16xf32>
    %c2 = arith.constant 2 : index
    %c0_19 = arith.constant 0 : index
    %c0_20 = arith.constant 0 : index
    %c0_21 = arith.constant 0 : index
    %48 = vector.load %arg2[%c2, %c0_19, %c0_20, %c0_21] : memref<4x8x8x1xf32, #tpu.memory_space<vmem>>, vector<1x8x8x1xf32>
    %49 = vector.shape_cast %48 : vector<1x8x8x1xf32> to vector<8x8x1xf32>
    %50 = vector.shape_cast %34 : vector<8x16xf32> to vector<1x8x16xf32>
    %51 = vector.broadcast %49 : vector<8x8x1xf32> to vector<8x8x16xf32>
    %52 = vector.broadcast %50 : vector<1x8x16xf32> to vector<8x8x16xf32>
    %53 = arith.mulf %51, %52 : vector<8x8x16xf32>
    %54 = arith.addf %47, %53 : vector<8x8x16xf32>
    %cst_22 = arith.constant dense<0xFF800000> : vector<8x8xf32>
    %55 = vector.multi_reduction <maximumf>, %54, %cst_22 [2] : vector<8x8x16xf32> to vector<8x8xf32>
    %56 = vector.shape_cast %55 : vector<8x8xf32> to vector<8x8x1xf32>
    %c3 = arith.constant 3 : index
    %c0_23 = arith.constant 0 : index
    %c0_24 = arith.constant 0 : index
    %c0_25 = arith.constant 0 : index
    %57 = vector.load %arg2[%c3, %c0_23, %c0_24, %c0_25] : memref<4x8x8x1xf32, #tpu.memory_space<vmem>>, vector<1x8x8x1xf32>
    %58 = vector.shape_cast %57 : vector<1x8x8x1xf32> to vector<8x8x1xf32>
    %59 = arith.addf %56, %58 : vector<8x8x1xf32>
    %cst_26 = arith.constant 0.000000e+00 : f32
    %60 = vector.broadcast %cst_26 : f32 to vector<8x8x1xf32>
    %61 = arith.maximumf %59, %60 : vector<8x8x1xf32>
    %62 = vector.extract_strided_slice %61 {offsets = [0, 0, 0], sizes = [1, 8, 1], strides = [1, 1, 1]} : vector<8x8x1xf32> to vector<1x8x1xf32>
    %63 = vector.shape_cast %62 : vector<1x8x1xf32> to vector<8x1xf32>
    %64 = vector.extract_strided_slice %61 {offsets = [1, 0, 0], sizes = [1, 8, 1], strides = [1, 1, 1]} : vector<8x8x1xf32> to vector<1x8x1xf32>
    %65 = vector.shape_cast %64 : vector<1x8x1xf32> to vector<8x1xf32>
    %66 = vector.extract_strided_slice %61 {offsets = [2, 0, 0], sizes = [1, 8, 1], strides = [1, 1, 1]} : vector<8x8x1xf32> to vector<1x8x1xf32>
    %67 = vector.shape_cast %66 : vector<1x8x1xf32> to vector<8x1xf32>
    %68 = vector.extract_strided_slice %61 {offsets = [3, 0, 0], sizes = [1, 8, 1], strides = [1, 1, 1]} : vector<8x8x1xf32> to vector<1x8x1xf32>
    %69 = vector.shape_cast %68 : vector<1x8x1xf32> to vector<8x1xf32>
    %70 = vector.extract_strided_slice %61 {offsets = [4, 0, 0], sizes = [1, 8, 1], strides = [1, 1, 1]} : vector<8x8x1xf32> to vector<1x8x1xf32>
    %71 = vector.shape_cast %70 : vector<1x8x1xf32> to vector<8x1xf32>
    %72 = vector.extract_strided_slice %61 {offsets = [5, 0, 0], sizes = [1, 8, 1], strides = [1, 1, 1]} : vector<8x8x1xf32> to vector<1x8x1xf32>
    %73 = vector.shape_cast %72 : vector<1x8x1xf32> to vector<8x1xf32>
    %74 = vector.extract_strided_slice %61 {offsets = [6, 0, 0], sizes = [1, 8, 1], strides = [1, 1, 1]} : vector<8x8x1xf32> to vector<1x8x1xf32>
    %75 = vector.shape_cast %74 : vector<1x8x1xf32> to vector<8x1xf32>
    %76 = vector.extract_strided_slice %61 {offsets = [7, 0, 0], sizes = [1, 8, 1], strides = [1, 1, 1]} : vector<8x8x1xf32> to vector<1x8x1xf32>
    %77 = vector.shape_cast %76 : vector<1x8x1xf32> to vector<8x1xf32>
    %78 = tpu.concatenate %63, %65, %67, %69, %71, %73, %75, %77 in 1 : vector<8x1xf32>, vector<8x1xf32>, vector<8x1xf32>, vector<8x1xf32>, vector<8x1xf32>, vector<8x1xf32>, vector<8x1xf32>, vector<8x1xf32> -> vector<8x8xf32>
    %79 = tpu.concatenate %78, %18, %25, %27, %29 in 1 : vector<8x8xf32>, vector<8x1xf32>, vector<8x1xf32>, vector<8x1xf32>, vector<8x1xf32> -> vector<8x12xf32>
    %80 = vector.extract_strided_slice %79 {offsets = [0, 0], sizes = [2, 12], strides = [1, 1]} : vector<8x12xf32> to vector<2x12xf32>
    %81 = vector.extract_strided_slice %79 {offsets = [2, 0], sizes = [2, 12], strides = [1, 1]} : vector<8x12xf32> to vector<2x12xf32>
    %82 = vector.extract_strided_slice %79 {offsets = [4, 0], sizes = [2, 12], strides = [1, 1]} : vector<8x12xf32> to vector<2x12xf32>
    %83 = vector.extract_strided_slice %79 {offsets = [6, 0], sizes = [2, 12], strides = [1, 1]} : vector<8x12xf32> to vector<2x12xf32>
    %cst_27 = arith.constant 0.000000e+00 : f32
    %84 = vector.broadcast %cst_27 : f32 to vector<2x80xf32>
    %85 = tpu.concatenate %80, %81, %82, %83, %84 in 1 : vector<2x12xf32>, vector<2x12xf32>, vector<2x12xf32>, vector<2x12xf32>, vector<2x80xf32> -> vector<2x128xf32>
    %c0_28 = arith.constant 0 : index
    %c0_29 = arith.constant 0 : index
    %86 = vector.load %arg3[%c0_28, %c0_29] : memref<128x64xf32, #tpu.memory_space<vmem>>, vector<128x64xf32>
    %cst_30 = arith.constant dense<0.000000e+00> : vector<2x64xf32>
    %87 = tpu.matmul %85, %86, %cst_30 {dimension_numbers = #tpu.dot_dimension_numbers<[1], [0], [0], [1], [0, 0, 1, 1], [], []>} : vector<2x128xf32>, vector<128x64xf32>, vector<2x64xf32> -> vector<2x64xf32>
    %c0_31 = arith.constant 0 : index
    %c0_32 = arith.constant 0 : index
    %88 = vector.load %arg4[%c0_31, %c0_32] : memref<1x64xf32, #tpu.memory_space<vmem>>, vector<1x64xf32>
    %89 = vector.broadcast %88 : vector<1x64xf32> to vector<2x64xf32>
    %90 = arith.addf %87, %89 : vector<2x64xf32>
    %cst_33 = arith.constant 0.000000e+00 : f32
    %91 = vector.broadcast %cst_33 : f32 to vector<2x64xf32>
    %92 = arith.maximumf %90, %91 : vector<2x64xf32>
    %c0_34 = arith.constant 0 : index
    %c0_35 = arith.constant 0 : index
    %93 = vector.load %arg5[%c0_34, %c0_35] : memref<64x32xf32, #tpu.memory_space<vmem>>, vector<64x32xf32>
    %cst_36 = arith.constant dense<0.000000e+00> : vector<2x32xf32>
    %94 = tpu.matmul %92, %93, %cst_36 {dimension_numbers = #tpu.dot_dimension_numbers<[1], [0], [0], [1], [0, 0, 1, 1], [], []>} : vector<2x64xf32>, vector<64x32xf32>, vector<2x32xf32> -> vector<2x32xf32>
    %c0_37 = arith.constant 0 : index
    %c0_38 = arith.constant 0 : index
    %95 = vector.load %arg6[%c0_37, %c0_38] : memref<1x32xf32, #tpu.memory_space<vmem>>, vector<1x32xf32>
    %96 = vector.broadcast %95 : vector<1x32xf32> to vector<2x32xf32>
    %97 = arith.addf %94, %96 : vector<2x32xf32>
    %cst_39 = arith.constant 0.000000e+00 : f32
    %98 = vector.broadcast %cst_39 : f32 to vector<2x32xf32>
    %99 = arith.maximumf %97, %98 : vector<2x32xf32>
    %c0_40 = arith.constant 0 : index
    %c0_41 = arith.constant 0 : index
    %100 = vector.load %arg7[%c0_40, %c0_41] : memref<32x16xf32, #tpu.memory_space<vmem>>, vector<32x16xf32>
    %cst_42 = arith.constant dense<0.000000e+00> : vector<2x16xf32>
    %101 = tpu.matmul %99, %100, %cst_42 {dimension_numbers = #tpu.dot_dimension_numbers<[1], [0], [0], [1], [0, 0, 1, 1], [], []>} : vector<2x32xf32>, vector<32x16xf32>, vector<2x16xf32> -> vector<2x16xf32>
    %c0_43 = arith.constant 0 : index
    %c0_44 = arith.constant 0 : index
    %102 = vector.load %arg8[%c0_43, %c0_44] : memref<1x16xf32, #tpu.memory_space<vmem>>, vector<1x16xf32>
    %103 = vector.broadcast %102 : vector<1x16xf32> to vector<2x16xf32>
    %104 = arith.addf %101, %103 : vector<2x16xf32>
    %cst_45 = arith.constant 0.000000e+00 : f32
    %105 = vector.broadcast %cst_45 : f32 to vector<2x16xf32>
    %106 = arith.maximumf %104, %105 : vector<2x16xf32>
    %c0_46 = arith.constant 0 : index
    %c0_47 = arith.constant 0 : index
    %107 = vector.load %arg9[%c0_46, %c0_47] : memref<16x2xf32, #tpu.memory_space<vmem>>, vector<16x2xf32>
    %cst_48 = arith.constant dense<0.000000e+00> : vector<2x2xf32>
    %108 = tpu.matmul %106, %107, %cst_48 {dimension_numbers = #tpu.dot_dimension_numbers<[1], [0], [0], [1], [0, 0, 1, 1], [], []>} : vector<2x16xf32>, vector<16x2xf32>, vector<2x2xf32> -> vector<2x2xf32>
    %c0_49 = arith.constant 0 : index
    %c0_50 = arith.constant 0 : index
    %109 = vector.load %arg10[%c0_49, %c0_50] : memref<1x2xf32, #tpu.memory_space<vmem>>, vector<1x2xf32>
    %110 = vector.broadcast %109 : vector<1x2xf32> to vector<2x2xf32>
    %111 = arith.addf %108, %110 : vector<2x2xf32>
    %c0_51 = arith.constant 0 : index
    %c0_52 = arith.constant 0 : index
    %112 = vector.load %arg11[%c0_51, %c0_52] : memref<2x2xf32, #tpu.memory_space<vmem>>, vector<2x2xf32>
    tpu.vector_store %arg11[%c0_51, %c0_52], %111 {strides = array<i32>} : memref<2x2xf32, #tpu.memory_space<vmem>>, vector<2x2xf32>,
    return
  }
}

</mosaic_0001>

<llo_original>
// kernel: fault_prediction_forward.1
$region0: #{fault_prediction_forward.1}
  #allocation0 [shape = 'u32[]', space=smem, size = 0x4, offset = 0x4, fixed_abs, tag = 'smem constant byte address 0x4 - core index']
  #allocation1 [shape = 'u32[72,128]{1,0:T(1,128)}', space=vmem, size = 0x9000, scoped, tag = 'internal scratch']
  %s0 = inlined_call_operand.vmem [shape: f32[8,16], index: 0, kind: input, shape index: {}]
  %s1 = inlined_call_operand.vmem [shape: f32[8,1], index: 1, kind: input, shape index: {}]
  %s2 = inlined_call_operand.vmem [shape: f32[4,8,8,1], index: 2, kind: input, shape index: {}]
  %s3 = inlined_call_operand.vmem [shape: f32[128,64], index: 3, kind: input, shape index: {}]
  %s4 = inlined_call_operand.vmem [shape: f32[1,64], index: 4, kind: input, shape index: {}]
  %s5 = inlined_call_operand.vmem [shape: f32[64,32], index: 5, kind: input, shape index: {}]
  %s6 = inlined_call_operand.vmem [shape: f32[1,32], index: 6, kind: input, shape index: {}]
  %s7 = inlined_call_operand.vmem [shape: f32[32,16], index: 7, kind: input, shape index: {}]
  %s8 = inlined_call_operand.vmem [shape: f32[1,16], index: 8, kind: input, shape index: {}]
  %s9 = inlined_call_operand.vmem [shape: f32[16,2], index: 9, kind: input, shape index: {}]
  %s10 = inlined_call_operand.vmem [shape: f32[1,2], index: 10, kind: input, shape index: {}]
  %s11 = inlined_call_operand.hbm [shape: f32[2,2], index: 11, kind: output, shape index: {}]
  %s12 = sld [smem:[#allocation0]]
  $region54: #{fault_prediction_forward.1} parent=0
    _
  %s14 = ssub.s32 1, %s12
  %s15 = scalar_select 0, %s14, %s12
  $region1: #{fault_prediction_forward.1} parent=0
    #allocation2 [shape = 'u8[1024]{0}', space=vmem, size = 0x400, scoped, tag = 'output window, operand 0, single buffered']
    #allocation3 [shape = 's32[1]{0}', space=sflag, size = 0x4, scoped, tag = 'scoped memory for fault_prediction_forward.1']
    %16 = vsyncpa [#allocation3], 0
    // Predicated region
    $region2: #{fault_prediction_forward.1} parent=1 // pred_check
      _
    $region3: #{fault_prediction_forward.1} parent=1 // pred_check_branch
      %18 = sbr.rel (0) target = $region5
    $region4: #{fault_prediction_forward.1} parent=1 // pred_region
      _
    $region5: #{fault_prediction_forward.1} parent=1 // pred_fallthru
      _
    // Predicated region
    $region6: #{fault_prediction_forward.1} parent=1 // pred_check
      _
    $region7: #{fault_prediction_forward.1} parent=1 // pred_check_branch
      %20 = sbr.rel (0) target = $region9
    $region8: #{fault_prediction_forward.1} parent=1 // pred_region
      _
    $region9: #{fault_prediction_forward.1} parent=1 // pred_fallthru
      _
    // Predicated region
    $region10: #{fault_prediction_forward.1} parent=1 // pred_check
      _
    $region11: #{fault_prediction_forward.1} parent=1 // pred_check_branch
      %22 = sbr.rel (0) target = $region13
    $region12: #{fault_prediction_forward.1} parent=1 // pred_region
      _
    $region13: #{fault_prediction_forward.1} parent=1 // pred_fallthru
      _
    // Predicated region
    $region14: #{fault_prediction_forward.1} parent=1 // pred_check
      _
    $region15: #{fault_prediction_forward.1} parent=1 // pred_check_branch
      %24 = sbr.rel (0) target = $region17
    $region16: #{fault_prediction_forward.1} parent=1 // pred_region
      _
    $region17: #{fault_prediction_forward.1} parent=1 // pred_fallthru
      _
    // Predicated region
    $region18: #{fault_prediction_forward.1} parent=1 // pred_check
      _
    $region19: #{fault_prediction_forward.1} parent=1 // pred_check_branch
      %26 = sbr.rel (0) target = $region21
    $region20: #{fault_prediction_forward.1} parent=1 // pred_region
      _
    $region21: #{fault_prediction_forward.1} parent=1 // pred_fallthru
      _
    // Predicated region
    $region22: #{fault_prediction_forward.1} parent=1 // pred_check
      _
    $region23: #{fault_prediction_forward.1} parent=1 // pred_check_branch
      %28 = sbr.rel (0) target = $region25
    $region24: #{fault_prediction_forward.1} parent=1 // pred_region
      _
    $region25: #{fault_prediction_forward.1} parent=1 // pred_fallthru
      _
    // Predicated region
    $region26: #{fault_prediction_forward.1} parent=1 // pred_check
      _
    $region27: #{fault_prediction_forward.1} parent=1 // pred_check_branch
      %30 = sbr.rel (0) target = $region29
    $region28: #{fault_prediction_forward.1} parent=1 // pred_region
      _
    $region29: #{fault_prediction_forward.1} parent=1 // pred_fallthru
      _
    // Predicated region
    $region30: #{fault_prediction_forward.1} parent=1 // pred_check
      _
    $region31: #{fault_prediction_forward.1} parent=1 // pred_check_branch
      %32 = sbr.rel (0) target = $region33
    $region32: #{fault_prediction_forward.1} parent=1 // pred_region
      _
    $region33: #{fault_prediction_forward.1} parent=1 // pred_fallthru
      _
    // Predicated region
    $region34: #{fault_prediction_forward.1} parent=1 // pred_check
      _
    $region35: #{fault_prediction_forward.1} parent=1 // pred_check_branch
      %34 = sbr.rel (0) target = $region37
    $region36: #{fault_prediction_forward.1} parent=1 // pred_region
      _
    $region37: #{fault_prediction_forward.1} parent=1 // pred_fallthru
      _
    // Predicated region
    $region38: #{fault_prediction_forward.1} parent=1 // pred_check
      _
    $region39: #{fault_prediction_forward.1} parent=1 // pred_check_branch
      %36 = sbr.rel (0) target = $region41
    $region40: #{fault_prediction_forward.1} parent=1 // pred_region
      _
    $region41: #{fault_prediction_forward.1} parent=1 // pred_fallthru
      _
    // Predicated region
    $region42: #{fault_prediction_forward.1} parent=1 // pred_check
      _
    $region43: #{fault_prediction_forward.1} parent=1 // pred_check_branch
      %38 = sbr.rel (0) target = $region45
    $region44: #{fault_prediction_forward.1} parent=1 // pred_region
      _
    $region45: #{fault_prediction_forward.1} parent=1 // pred_fallthru
      _
    %v39 = vld [vmem:[%s1] sm:$0xff]
    %vm40 = vcmask 7168
    %v41 = vsel %vm40, %v39, -inf
    %v42 = vrot.slane %v41, 4
    %v43 = vmax.f32 %v41, %v42
    %v44 = vrot.slane %v43, 2
    %v45 = vmax.f32 %v43, %v44
    %v46 = vrot.slane %v45, 1
    %v47 = vmax.f32 %v45, %v46
    %v48 = vsub.f32 %v39, %v47
    %v49 = vmul.f32 %v48, 1.442695
    %v50 = vpow.pop %v49
    %v51 = vsel %vm40, %v50, 0.0
    %v52 = vrot.slane %v51, 4
    %v53 = vadd.f32 %v51, %v52
    %v54 = vrot.slane %v53, 2
    %v55 = vadd.f32 %v53, %v54
    %v56 = vrot.slane %v55, 1
    %v57 = vadd.f32 %v55, %v56
    %v58 = vrcp.pop %v57
    %v59 = vmul.f32 %v57, %v58
    %v60 = vsub.f32 1.0, %v59
    %v61 = vmul.f32 %v58, %v60
    %v62 = vadd.f32 %v58, %v61
    %vm63 = vweird.f32 %v57
    %vm64 = vweird.f32 %v58
    %vm65 = vmor %vm63, %vm64
    %v66 = vsel %vm65, %v58, %v62
    %v67 = vand.u32 2147483647, %v57
    %vm68 = vcmp.eq.f32.partialorder %v67, 8.507059e+37
    %v69 = vand.u32 %v57, 2147483648
    %v70 = vor.u32 1.1754944e-38, %v69
    %v71 = vsel %vm68, %v70, %v66
    %v72 = vmul.f32 2.0, %v71
    %v73 = vmul.f32 %v50, %v72
    %v74 = vld [vmem:[%s0] sm:$0xff]
    %76 = vset.pattern.permute.xlu0 0
    %77 = vperm.xlu0 %76, %v73
    %v78 = vpop.permute.xlu0 %77
    %v80 = vmul.f32 %v74, %v78
    %vm81 = vcmask 130048
    %v82 = vsel %vm81, %v80, 0.0
    %83 = vadd.xlane.f32.xlu0 %v82
    %v84 = vpop.xlane.xlu0 %83
    %v85 = vrcp.pop 16.0
    %v86 = vmul.f32 16.0, %v85
    %v87 = vsub.f32 1.0, %v86
    %v88 = vmul.f32 %v85, %v87
    %v89 = vadd.f32 %v85, %v88
    %vm90 = vweird.f32 %v85
    %v91 = vsel %vm90, %v85, %v89
    %v92 = vmul.f32 %v84, %v91
    %v93 = vsub.f32 %v80, %v92
    %v94 = vmul.f32 %v93, %v93
    %v95 = vsel %vm81, %v94, 0.0
    %96 = vadd.xlane.f32.xlu0 %v95
    %v97 = vpop.xlane.xlu0 %96
    %v98 = vmul.f32 %v97, %v91
    %v99 = vsel %vm81, %v80, -inf
    %100 = vmax.xlane.f32.xlu0 %v99
    %v101 = vpop.xlane.xlu0 %100
    %v102 = vsel %vm81, %v80, inf
    %103 = vmin.xlane.f32.xlu0 %v102
    %v104 = vpop.xlane.xlu0 %103
    %106 = vrot.lane.b32.xlu0 %v80, 1
    %v107 = vpop.permute.xlu0 %106
    %v109 = vsel %vm40, 0.0, %v107
    %110 = vrot.lane.b32.xlu0 %v80, 127
    %v111 = vpop.permute.xlu0 %110
    %vm113 = vcmask 121856
    %v114 = vsel %vm113, %v111, 0.0
    %v115 = vld [vmem:[%s2] sm:$0xff]
    %v116 = vld [vmem:[%s2 + $0x8] sm:$0xff]
    %v117 = vld [vmem:[%s2 + $0x10] sm:$0xff]
    %v118 = vld [vmem:[%s2 + $0x18] sm:$0xff]
    %v119 = vld [vmem:[%s2 + $0x20] sm:$0xff]
    %v120 = vld [vmem:[%s2 + $0x28] sm:$0xff]
    %v121 = vld [vmem:[%s2 + $0x30] sm:$0xff]
    %v122 = vld [vmem:[%s2 + $0x38] sm:$0xff]
    %124 = vset.pattern.permute.xlu0 0
    %125 = vperm.xlu0 %124, %v115
    %v126 = vpop.permute.xlu0 %125
    %129 = vset.pattern.permute.xlu0 0
    %130 = vperm.xlu0 %129, %v116
    %v131 = vpop.permute.xlu0 %130
    %134 = vset.pattern.permute.xlu0 0
    %135 = vperm.xlu0 %134, %v117
    %v136 = vpop.permute.xlu0 %135
    %139 = vset.pattern.permute.xlu0 0
    %140 = vperm.xlu0 %139, %v118
    %v141 = vpop.permute.xlu0 %140
    %144 = vset.pattern.permute.xlu0 0
    %145 = vperm.xlu0 %144, %v119
    %v146 = vpop.permute.xlu0 %145
    %149 = vset.pattern.permute.xlu0 0
    %150 = vperm.xlu0 %149, %v120
    %v151 = vpop.permute.xlu0 %150
    %154 = vset.pattern.permute.xlu0 0
    %155 = vperm.xlu0 %154, %v121
    %v156 = vpop.permute.xlu0 %155
    %159 = vset.pattern.permute.xlu0 0
    %160 = vperm.xlu0 %159, %v122
    %v161 = vpop.permute.xlu0 %160
    %v163 = vmul.f32 %v126, %v109
    %v164 = vmul.f32 %v131, %v109
    %v165 = vmul.f32 %v136, %v109
    %v166 = vmul.f32 %v141, %v109
    %v167 = vmul.f32 %v146, %v109
    %v168 = vmul.f32 %v151, %v109
    %v169 = vmul.f32 %v156, %v109
    %v170 = vmul.f32 %v161, %v109
    %s171 = scalar_lea.vmem %s2, 64
    %v172 = vld [vmem:[%s171] sm:$0xff]
    %v173 = vld [vmem:[%s171 + $0x8] sm:$0xff]
    %v174 = vld [vmem:[%s171 + $0x10] sm:$0xff]
    %v175 = vld [vmem:[%s171 + $0x18] sm:$0xff]
    %v176 = vld [vmem:[%s171 + $0x20] sm:$0xff]
    %v177 = vld [vmem:[%s171 + $0x28] sm:$0xff]
    %v178 = vld [vmem:[%s171 + $0x30] sm:$0xff]
    %v179 = vld [vmem:[%s171 + $0x38] sm:$0xff]
    %181 = vset.pattern.permute.xlu0 0
    %182 = vperm.xlu0 %181, %v172
    %v183 = vpop.permute.xlu0 %182
    %186 = vset.pattern.permute.xlu0 0
    %187 = vperm.xlu0 %186, %v173
    %v188 = vpop.permute.xlu0 %187
    %191 = vset.pattern.permute.xlu0 0
    %192 = vperm.xlu0 %191, %v174
    %v193 = vpop.permute.xlu0 %192
    %196 = vset.pattern.permute.xlu0 0
    %197 = vperm.xlu0 %196, %v175
    %v198 = vpop.permute.xlu0 %197
    %201 = vset.pattern.permute.xlu0 0
    %202 = vperm.xlu0 %201, %v176
    %v203 = vpop.permute.xlu0 %202
    %206 = vset.pattern.permute.xlu0 0
    %207 = vperm.xlu0 %206, %v177
    %v208 = vpop.permute.xlu0 %207
    %211 = vset.pattern.permute.xlu0 0
    %212 = vperm.xlu0 %211, %v178
    %v213 = vpop.permute.xlu0 %212
    %216 = vset.pattern.permute.xlu0 0
    %217 = vperm.xlu0 %216, %v179
    %v218 = vpop.permute.xlu0 %217
    %v220 = vmul.f32 %v183, %v80
    %v221 = vmul.f32 %v188, %v80
    %v222 = vmul.f32 %v193, %v80
    %v223 = vmul.f32 %v198, %v80
    %v224 = vmul.f32 %v203, %v80
    %v225 = vmul.f32 %v208, %v80
    %v226 = vmul.f32 %v213, %v80
    %v227 = vmul.f32 %v218, %v80
    %v228 = vadd.f32 %v163, %v220
    %v229 = vadd.f32 %v164, %v221
    %v230 = vadd.f32 %v165, %v222
    %v231 = vadd.f32 %v166, %v223
    %v232 = vadd.f32 %v167, %v224
    %v233 = vadd.f32 %v168, %v225
    %v234 = vadd.f32 %v169, %v226
    %v235 = vadd.f32 %v170, %v227
    %s236 = scalar_lea.vmem %s2, 128
    %v237 = vld [vmem:[%s236] sm:$0xff]
    %v238 = vld [vmem:[%s236 + $0x8] sm:$0xff]
    %v239 = vld [vmem:[%s236 + $0x10] sm:$0xff]
    %v240 = vld [vmem:[%s236 + $0x18] sm:$0xff]
    %v241 = vld [vmem:[%s236 + $0x20] sm:$0xff]
    %v242 = vld [vmem:[%s236 + $0x28] sm:$0xff]
    %v243 = vld [vmem:[%s236 + $0x30] sm:$0xff]
    %v244 = vld [vmem:[%s236 + $0x38] sm:$0xff]
    %246 = vset.pattern.permute.xlu0 0
    %247 = vperm.xlu0 %246, %v237
    %v248 = vpop.permute.xlu0 %247
    %251 = vset.pattern.permute.xlu0 0
    %252 = vperm.xlu0 %251, %v238
    %v253 = vpop.permute.xlu0 %252
    %256 = vset.pattern.permute.xlu0 0
    %257 = vperm.xlu0 %256, %v239
    %v258 = vpop.permute.xlu0 %257
    %261 = vset.pattern.permute.xlu0 0
    %262 = vperm.xlu0 %261, %v240
    %v263 = vpop.permute.xlu0 %262
    %266 = vset.pattern.permute.xlu0 0
    %267 = vperm.xlu0 %266, %v241
    %v268 = vpop.permute.xlu0 %267
    %271 = vset.pattern.permute.xlu0 0
    %272 = vperm.xlu0 %271, %v242
    %v273 = vpop.permute.xlu0 %272
    %276 = vset.pattern.permute.xlu0 0
    %277 = vperm.xlu0 %276, %v243
    %v278 = vpop.permute.xlu0 %277
    %281 = vset.pattern.permute.xlu0 0
    %282 = vperm.xlu0 %281, %v244
    %v283 = vpop.permute.xlu0 %282
    %v285 = vmul.f32 %v248, %v114
    %v286 = vmul.f32 %v253, %v114
    %v287 = vmul.f32 %v258, %v114
    %v288 = vmul.f32 %v263, %v114
    %v289 = vmul.f32 %v268, %v114
    %v290 = vmul.f32 %v273, %v114
    %v291 = vmul.f32 %v278, %v114
    %v292 = vmul.f32 %v283, %v114
    %v293 = vadd.f32 %v228, %v285
    %v294 = vadd.f32 %v229, %v286
    %v295 = vadd.f32 %v230, %v287
    %v296 = vadd.f32 %v231, %v288
    %v297 = vadd.f32 %v232, %v289
    %v298 = vadd.f32 %v233, %v290
    %v299 = vadd.f32 %v234, %v291
    %v300 = vadd.f32 %v235, %v292
    %v301 = vsel %vm81, %v293, -inf
    %302 = vmax.xlane.f32.xlu0 %v301
    %v303 = vpop.xlane.xlu0 %302
    %v304 = vsel %vm81, %v294, -inf
    %305 = vmax.xlane.f32.xlu0 %v304
    %v306 = vpop.xlane.xlu0 %305
    %v307 = vsel %vm81, %v295, -inf
    %308 = vmax.xlane.f32.xlu0 %v307
    %v309 = vpop.xlane.xlu0 %308
    %v310 = vsel %vm81, %v296, -inf
    %311 = vmax.xlane.f32.xlu0 %v310
    %v312 = vpop.xlane.xlu0 %311
    %v313 = vsel %vm81, %v297, -inf
    %314 = vmax.xlane.f32.xlu0 %v313
    %v315 = vpop.xlane.xlu0 %314
    %v316 = vsel %vm81, %v298, -inf
    %317 = vmax.xlane.f32.xlu0 %v316
    %v318 = vpop.xlane.xlu0 %317
    %v319 = vsel %vm81, %v299, -inf
    %320 = vmax.xlane.f32.xlu0 %v319
    %v321 = vpop.xlane.xlu0 %320
    %v322 = vsel %vm81, %v300, -inf
    %323 = vmax.xlane.f32.xlu0 %v322
    %v324 = vpop.xlane.xlu0 %323
    %s325 = scalar_lea.vmem %s2, 192
    %v326 = vld [vmem:[%s325] sm:$0xff]
    %v327 = vld [vmem:[%s325 + $0x8] sm:$0xff]
    %v328 = vld [vmem:[%s325 + $0x10] sm:$0xff]
    %v329 = vld [vmem:[%s325 + $0x18] sm:$0xff]
    %v330 = vld [vmem:[%s325 + $0x20] sm:$0xff]
    %v331 = vld [vmem:[%s325 + $0x28] sm:$0xff]
    %v332 = vld [vmem:[%s325 + $0x30] sm:$0xff]
    %v333 = vld [vmem:[%s325 + $0x38] sm:$0xff]
    %v334 = vadd.f32 %v303, %v326
    %v335 = vadd.f32 %v306, %v327
    %v336 = vadd.f32 %v309, %v328
    %v337 = vadd.f32 %v312, %v329
    %v338 = vadd.f32 %v315, %v330
    %v339 = vadd.f32 %v318, %v331
    %v340 = vadd.f32 %v321, %v332
    %v341 = vadd.f32 %v324, %v333
    %v342 = vmax.f32 %v334, 0.0
    %v343 = vmax.f32 %v335, 0.0
    %v344 = vmax.f32 %v336, 0.0
    %v345 = vmax.f32 %v337, 0.0
    %v346 = vmax.f32 %v338, 0.0
    %v347 = vmax.f32 %v339, 0.0
    %v348 = vmax.f32 %v340, 0.0
    %v349 = vmax.f32 %v341, 0.0
    %351 = vrot.lane.b32.xlu0 %v343, 1
    %v352 = vpop.permute.xlu0 %351
    %355 = vrot.lane.b32.xlu0 %v344, 2
    %v356 = vpop.permute.xlu0 %355
    %359 = vrot.lane.b32.xlu0 %v345, 3
    %v360 = vpop.permute.xlu0 %359
    %363 = vrot.lane.b32.xlu0 %v346, 4
    %v364 = vpop.permute.xlu0 %363
    %367 = vrot.lane.b32.xlu0 %v347, 5
    %v368 = vpop.permute.xlu0 %367
    %371 = vrot.lane.b32.xlu0 %v348, 6
    %v372 = vpop.permute.xlu0 %371
    %375 = vrot.lane.b32.xlu0 %v349, 7
    %v376 = vpop.permute.xlu0 %375
    %v378 = vsel %vm40, %v342, %v352
    %vm379 = vcmask 15360
    %v380 = vsel %vm379, %v378, %v356
    %vm381 = vcmask 23552
    %v382 = vsel %vm381, %v380, %v360
    %vm383 = vcmask 31744
    %v384 = vsel %vm383, %v382, %v364
    %vm385 = vcmask 39936
    %v386 = vsel %vm385, %v384, %v368
    %vm387 = vcmask 48128
    %v388 = vsel %vm387, %v386, %v372
    %vm389 = vcmask 56320
    %v390 = vsel %vm389, %v388, %v376
    %vm391 = vcmask 64512
    %v392 = vsel %vm391, %v390, %v92
    %vm393 = vcmask 72704
    %v394 = vsel %vm393, %v392, %v98
    %vm395 = vcmask 80896
    %v396 = vsel %vm395, %v394, %v101
    %vm397 = vcmask 89088
    %v398 = vsel %vm397, %v396, %v104
    %v400 = vrot.slane %v398, 2
    %401 = vrot.lane.b32.xlu0 %v400, 12
    %v402 = vpop.permute.xlu0 %401
    %v404 = vrot.slane %v398, 4
    %405 = vrot.lane.b32.xlu0 %v404, 24
    %v406 = vpop.permute.xlu0 %405
    %v408 = vrot.slane %v398, 6
    %409 = vrot.lane.b32.xlu0 %v408, 36
    %v410 = vpop.permute.xlu0 %409
    %vm412 = vcmask 97280
    %v413 = vsel %vm412, %v398, %v402
    %vm414 = vcmask 195584
    %v415 = vsel %vm414, %v413, %v406
    %vm416 = vcmask 293888
    %v417 = vsel %vm416, %v415, %v410
    %vm418 = vcmask 392192
    %v419 = vsel %vm418, %v417, 0.0
    %v420 = vld [vmem:[%s3] sm:$0xff]
    %v421 = vld [vmem:[%s3 + $0x8] sm:$0xff]
    %v422 = vld [vmem:[%s3 + $0x10] sm:$0xff]
    %v423 = vld [vmem:[%s3 + $0x18] sm:$0xff]
    %v424 = vld [vmem:[%s3 + $0x20] sm:$0xff]
    %v425 = vld [vmem:[%s3 + $0x28] sm:$0xff]
    %v426 = vld [vmem:[%s3 + $0x30] sm:$0xff]
    %v427 = vld [vmem:[%s3 + $0x38] sm:$0xff]
    %v428 = vld [vmem:[%s3 + $0x40] sm:$0xff]
    %v429 = vld [vmem:[%s3 + $0x48] sm:$0xff]
    %v430 = vld [vmem:[%s3 + $0x50] sm:$0xff]
    %v431 = vld [vmem:[%s3 + $0x58] sm:$0xff]
    %v432 = vld [vmem:[%s3 + $0x60] sm:$0xff]
    %v433 = vld [vmem:[%s3 + $0x68] sm:$0xff]
    %v434 = vld [vmem:[%s3 + $0x70] sm:$0xff]
    %v435 = vld [vmem:[%s3 + $0x78] sm:$0xff]
    %v436 = vld [vmem:[%s4] sm:$0x1]
    %v438 = vperm.slane %v436, 0
    %440 = vmatpush.msra.mxu0 %v435
    %441 = vmatpush.msra.mxu0 %v434
    %442 = vmatpush.msra.mxu0 %v433
    %443 = vmatpush.msra.mxu0 %v432
    %444 = vmatpush.msra.mxu0 %v431
    %445 = vmatpush.msra.mxu0 %v430
    %446 = vmatpush.msra.mxu0 %v429
    %447 = vmatpush.msra.mxu0 %v428
    %448 = vmatpush.msra.mxu0 %v427
    %449 = vmatpush.msra.mxu0 %v426
    %450 = vmatpush.msra.mxu0 %v425
    %451 = vmatpush.msra.mxu0 %v424
    %452 = vmatpush.msra.mxu0 %v423
    %453 = vmatpush.msra.mxu0 %v422
    %454 = vmatpush.msra.mxu0 %v421
    %455 = vmatpush.msra.mxu0 %v420
    %456 = vmatmul.f32.gmra.mxu0 %v419
    %v457 = vpop.f32.mrf.mxu0
    %v458 = vadd.f32 %v438, %v457
    %459 = vdwg.mxu0
    %v460 = vmax.f32 %v458, 0.0
    %v461 = vld [vmem:[%s5] sm:$0xff]
    %v462 = vld [vmem:[%s5 + $0x8] sm:$0xff]
    %v463 = vld [vmem:[%s5 + $0x10] sm:$0xff]
    %v464 = vld [vmem:[%s5 + $0x18] sm:$0xff]
    %v465 = vld [vmem:[%s5 + $0x20] sm:$0xff]
    %v466 = vld [vmem:[%s5 + $0x28] sm:$0xff]
    %v467 = vld [vmem:[%s5 + $0x30] sm:$0xff]
    %v468 = vld [vmem:[%s5 + $0x38] sm:$0xff]
    %v469 = vld [vmem:[%s6] sm:$0x1]
    %v471 = vperm.slane %v469, 0
    %vm473 = vcmask 523264
    %v475 = vsel %vm473, %v460, 0
    %477 = vmatpush.msra.mxu0 0.0
    %478 = vmatpush.msra.mxu0 0.0
    %479 = vmatpush.msra.mxu0 0.0
    %480 = vmatpush.msra.mxu0 0.0
    %481 = vmatpush.msra.mxu0 0.0
    %482 = vmatpush.msra.mxu0 0.0
    %483 = vmatpush.msra.mxu0 0.0
    %484 = vmatpush.msra.mxu0 0.0
    %485 = vmatpush.msra.mxu0 %v468
    %486 = vmatpush.msra.mxu0 %v467
    %487 = vmatpush.msra.mxu0 %v466
    %488 = vmatpush.msra.mxu0 %v465
    %489 = vmatpush.msra.mxu0 %v464
    %490 = vmatpush.msra.mxu0 %v463
    %491 = vmatpush.msra.mxu0 %v462
    %492 = vmatpush.msra.mxu0 %v461
    %493 = vmatmul.f32.gmra.mxu0 %v475
    %v494 = vpop.f32.mrf.mxu0
    %v495 = vadd.f32 %v471, %v494
    %496 = vdwg.mxu0
    %v497 = vmax.f32 %v495, 0.0
    %v498 = vld [vmem:[%s7] sm:$0xff]
    %v499 = vld [vmem:[%s7 + $0x8] sm:$0xff]
    %v500 = vld [vmem:[%s7 + $0x10] sm:$0xff]
    %v501 = vld [vmem:[%s7 + $0x18] sm:$0xff]
    %v502 = vld [vmem:[%s8] sm:$0x1]
    %v504 = vperm.slane %v502, 0
    %vm506 = vcmask 261120
    %v508 = vsel %vm506, %v497, 0
    %510 = vmatpush.msra.mxu0 0.0
    %511 = vmatpush.msra.mxu0 0.0
    %512 = vmatpush.msra.mxu0 0.0
    %513 = vmatpush.msra.mxu0 0.0
    %514 = vmatpush.msra.mxu0 0.0
    %515 = vmatpush.msra.mxu0 0.0
    %516 = vmatpush.msra.mxu0 0.0
    %517 = vmatpush.msra.mxu0 0.0
    %518 = vmatpush.msra.mxu0 0.0
    %519 = vmatpush.msra.mxu0 0.0
    %520 = vmatpush.msra.mxu0 0.0
    %521 = vmatpush.msra.mxu0 0.0
    %522 = vmatpush.msra.mxu0 %v501
    %523 = vmatpush.msra.mxu0 %v500
    %524 = vmatpush.msra.mxu0 %v499
    %525 = vmatpush.msra.mxu0 %v498
    %526 = vmatmul.f32.gmra.mxu0 %v508
    %v527 = vpop.f32.mrf.mxu0
    %v528 = vadd.f32 %v504, %v527
    %529 = vdwg.mxu0
    %v530 = vmax.f32 %v528, 0.0
    %v531 = vld [vmem:[%s9] sm:$0xff]
    %v532 = vld [vmem:[%s9 + $0x8] sm:$0xff]
    %v533 = vld [vmem:[%s10] sm:$0x1]
    %v535 = vperm.slane %v533, 0
    %v538 = vsel %vm81, %v530, 0
    %540 = vmatpush.msra.mxu0 0.0
    %541 = vmatpush.msra.mxu0 0.0
    %542 = vmatpush.msra.mxu0 0.0
    %543 = vmatpush.msra.mxu0 0.0
    %544 = vmatpush.msra.mxu0 0.0
    %545 = vmatpush.msra.mxu0 0.0
    %546 = vmatpush.msra.mxu0 0.0
    %547 = vmatpush.msra.mxu0 0.0
    %548 = vmatpush.msra.mxu0 0.0
    %549 = vmatpush.msra.mxu0 0.0
    %550 = vmatpush.msra.mxu0 0.0
    %551 = vmatpush.msra.mxu0 0.0
    %552 = vmatpush.msra.mxu0 0.0
    %553 = vmatpush.msra.mxu0 0.0
    %554 = vmatpush.msra.mxu0 %v532
    %555 = vmatpush.msra.mxu0 %v531
    %556 = vmatmul.f32.gmra.mxu0 %v538
    %v557 = vpop.f32.mrf.mxu0
    %v558 = vadd.f32 %v535, %v557
    %559 = vdwg.mxu0
    %vm560 = vcmask 9216
    %561 = vst.msk [vmem:[#allocation2] sm:$0x3] %vm560, %v558
    // Predicated region
    $region46: #{fault_prediction_forward.1} parent=1 // pred_check
      _
    $region47: #{fault_prediction_forward.1} parent=1 // pred_check_branch
      %563 = sbr.rel (0) target = $region49
    $region48: #{fault_prediction_forward.1} parent=1 // pred_region
      %565 = vsyncadd [#allocation3], 0
      %s567 = sshll.u32 [#allocation2], 4
      %s568 = int_to_ptr.vmem [resolvable:$true] %s567
      %s569 = sshll.u32 %s11, 4
      %s570 = int_to_ptr.hbm [resolvable:$true] %s569
      %572 = dma.vmem_to_hbm [thread:$0]  %s568, 32, %s570, [#allocation3]
    $region49: #{fault_prediction_forward.1} parent=1 // pred_fallthru
      _
    // Predicated region
    $region50: #{fault_prediction_forward.1} parent=1 // pred_check
      _
    $region51: #{fault_prediction_forward.1} parent=1 // pred_check_branch
      %574 = sbr.rel (0) target = $region53
    $region52: #{fault_prediction_forward.1} parent=1 // pred_region
      %576 = dma.done [#allocation3], 32
    $region53: #{fault_prediction_forward.1} parent=1 // pred_fallthru
      _
    %577 = vsyncpa [#allocation3], 1

</llo_original>
